<compile_context>
chip_gen: v7x
topology: tpu7x:2x2x1
jax: 0.10.0
libtpu: 0.0.40
codegen_flags: <defaults>
</compile_context>

<pallas_src>
import functools

import jax
import jax.numpy as jnp
from jax import lax
from jax.experimental import pallas as pl
from jax.experimental.pallas import tpu as pltpu


def _round_up(x, m):
    return ((x + m - 1) // m) * m


# -----------------------------------------------------------------------------
# Kernel: masked mean pooling over the sequence axis.
#   grid = (batch_tiles, hidden_tiles, seq_tiles); seq (reduction) axis last.
#   hs_ref:   [tb, ts, th]  hidden-state tile (input dtype)
#   mask_ref: [tb, ts, 1]   attention-mask tile (f32), seq on the sublane axis
#   o_ref:    [tb, th]      pooled output tile (resident across the seq axis)
#   acc_ref:  [tb, th] f32  numerator accumulator (VMEM scratch)
#   den_ref:  [tb, 1]  f32  denominator accumulator (VMEM scratch)
# -----------------------------------------------------------------------------
def mean_pooling_kernel(hs_ref, mask_ref, o_ref, acc_ref, den_ref, *,
                        seq_len, seq_tile):
    s = pl.program_id(2)

    @pl.when(s == 0)
    def _init():
        acc_ref[...] = jnp.zeros_like(acc_ref)
        den_ref[...] = jnp.zeros_like(den_ref)

    h = hs_ref[...]                      # [tb, ts, th], stays in input dtype
    m = mask_ref[...]                    # [tb, ts, 1]  f32

    # Seq-tail handling: only emitted when seq_tile does not divide seq_len.
    # OOB rows of the last seq tile hold unspecified bits; zero both operands
    # so garbage (possibly NaN/Inf) never reaches the accumulators.
    if seq_len % seq_tile != 0:
        pos = lax.broadcasted_iota(jnp.int32, (1, seq_tile, 1), 1) + s * seq_tile
        valid = pos < seq_len
        m = jnp.where(valid, m, jnp.zeros_like(m))
        h = jnp.where(valid, h, jnp.zeros_like(h))

    # Multiply in the input dtype (no blanket f32 upcast of the big tile for
    # bf16 inputs); widen to f32 at the accumulate.  The [tb, ts, 1] mask
    # broadcast over lanes is a free per-lane splat (no relayout).
    prod = h * m.astype(h.dtype)                               # [tb, ts, th]
    acc_ref[...] += jnp.sum(prod, axis=1, dtype=jnp.float32)   # [tb, th]
    den_ref[...] += jnp.sum(m, axis=1, dtype=jnp.float32)      # [tb, 1]

    @pl.when(s == pl.num_programs(2) - 1)
    def _finalize():
        # torch.clamp(mask_sum, min=1e-9); exact divide on the tiny epilogue.
        den = jnp.maximum(den_ref[...], 1e-9)
        o_ref[...] = (acc_ref[...] / den).astype(o_ref.dtype)


# -----------------------------------------------------------------------------
# Wrapper: mirrors MeanPooling.forward(hidden_state, attention_mask)
#   hidden_state:   [B, S, H]   (float32 or bfloat16)
#   attention_mask: [B, S]      (int or float)
# Returns [B, H] in hidden_state.dtype.
# -----------------------------------------------------------------------------
def mean_pooling(hidden_state, attention_mask, *, seq_tile_budget_bytes=12 << 20):
    B, S, H = hidden_state.shape
    itemsize = jnp.dtype(hidden_state.dtype).itemsize

    # Mask pre-shaped to [B, S, 1] (f32): seq lands on the sublane axis so the
    # in-kernel broadcast against [tb, ts, th] is free, and the denominator
    # accumulates exactly in f32.  Mask HBM traffic is negligible vs hidden.
    mask3 = attention_mask.reshape(B, S, 1).astype(jnp.float32)

    # ---- Tiling -------------------------------------------------------------
    # Batch tile: 8 rows (output sublane alignment) or the whole batch if small.
    tb = 8 if B >= 8 else B
    # Hidden tile: cap at 256 lanes -> <=16 live f32 accumulator vregs, and
    # >=2 "parallel" h entries at real hidden sizes (v7x megacore sharding).
    th = H if H <= 256 else 256
    # Seq tile: largest multiple of 8 whose *combined* single-buffer footprint
    # (hidden tile + lane-padded [tb, ts, 1] mask tile) stays within budget.
    # Guidance: ~8-16 MiB/buffer on v5e/v6e, ~6-12 MiB on v7x (64 MiB VMEM/TC);
    # 12 MiB default works on all generations with the explicit limit below.
    per_seq_row = tb * th * itemsize + tb * 128 * 4
    ts = max(8, (seq_tile_budget_bytes // per_seq_row) // 8 * 8)
    if ts >= S:
        ts = S                           # single seq tile, no tail handling

    grid = (pl.cdiv(B, tb), pl.cdiv(H, th), pl.cdiv(S, ts))

    # ---- Explicit VMEM budget (don't rely on per-generation scoped default) --
    hid_tile = tb * ts * th * itemsize
    msk_tile = tb * _round_up(ts, 8) * 128 * 4      # [tb, ts, 1] lane-pads to 128
    out_tile = _round_up(tb, 8) * _round_up(th, 128) * itemsize
    scratch = _round_up(tb, 8) * _round_up(th, 128) * 4 + _round_up(tb, 8) * 128 * 4
    vmem_need = 2 * (hid_tile + msk_tile) + 2 * out_tile + scratch
    vmem_limit = int(min(max(32 << 20, vmem_need + (4 << 20)), 60 << 20))

    kernel = functools.partial(mean_pooling_kernel, seq_len=S, seq_tile=ts)

    nh = grid[1]
    cost = pl.CostEstimate(
        flops=2 * B * S * H,
        transcendentals=0,
        bytes_accessed=B * S * H * itemsize + nh * B * S * 4 + B * H * itemsize,
    )

    return pl.pallas_call(
        kernel,
        out_shape=jax.ShapeDtypeStruct((B, H), hidden_state.dtype),
        grid_spec=pltpu.PrefetchScalarGridSpec(
            num_scalar_prefetch=0,
            grid=grid,
            in_specs=[
                pl.BlockSpec((tb, ts, th), lambda b, h, s: (b, s, h)),  # hidden
                pl.BlockSpec((tb, ts, 1), lambda b, h, s: (b, s, 0)),   # mask
            ],
            out_specs=pl.BlockSpec((tb, th), lambda b, h, s: (b, h)),   # resident over s
            scratch_shapes=[
                pltpu.VMEM((tb, th), jnp.float32),   # numerator accumulator
                pltpu.VMEM((tb, 1), jnp.float32),    # denominator accumulator
            ],
        ),
        compiler_params=pltpu.CompilerParams(
            dimension_semantics=("parallel", "parallel", "arbitrary"),
            vmem_limit_bytes=vmem_limit,
        ),
        cost_estimate=cost,
    )(hidden_state, mask3)


# -----------------------------------------------------------------------------
if __name__ == "__main__":
    # Small shapes consistent with the module: batch=2, seq=8, hidden=32.
    B, S, H = 2, 8, 32
    key = jax.random.PRNGKey(0)
    k_h, _ = jax.random.split(key)

    hidden_state = jax.random.normal(k_h, (B, S, H), dtype=jnp.float32)
    attention_mask = jnp.array(
        [[1, 1, 1, 1, 1, 1, 0, 0],
         [1, 1, 1, 1, 0, 0, 0, 0]], dtype=jnp.int32)

    out = mean_pooling(hidden_state, attention_mask)
    out = jax.block_until_ready(out)

    # Pure-JAX reference mirroring the torch semantics exactly.
    m = attention_mask.astype(jnp.float32)[:, :, None]
    ref = jnp.sum(hidden_state * m, axis=1) / jnp.maximum(jnp.sum(m, axis=1), 1e-9)

    assert out.shape == (B, H) and out.dtype == hidden_state.dtype
    assert bool(jnp.allclose(out, ref, rtol=1e-5, atol=1e-5))
    print("KERNEL_OK")
</pallas_src>

<mosaic_0001>
module attributes {stable_mosaic.version = 11 : i64} {
  func.func @mean_pooling_kernel(%arg0: i32, %arg1: i32, %arg2: i32, %arg3: memref<2x8x32xf32, #tpu.memory_space<vmem>>, %arg4: memref<2x8x1xf32, #tpu.memory_space<vmem>>, %arg5: memref<2x32xf32, #tpu.memory_space<vmem>>, %arg6: memref<2x32xf32, #tpu.memory_space<vmem>>, %arg7: memref<2x1xf32, #tpu.memory_space<vmem>>) attributes {dimension_semantics = [#tpu.dimension_semantics<parallel>, #tpu.dimension_semantics<parallel>, #tpu.dimension_semantics<arbitrary>], iteration_bounds = array<i64: 1, 1, 1>, scalar_prefetch = 0 : i64, scratch_operands = 2 : i64, tpu.core_type = #tpu.core_type<tc>, window_params = [{transform_indices = @transform_0, window_bounds = array<i64: 2, 8, 32>}, {transform_indices = @transform_1, window_bounds = array<i64: 2, 8, 1>}, {transform_indices = @transform_2, window_bounds = array<i64: 2, 32>}]} {
    %c0_i32 = arith.constant 0 : i32
    %0 = arith.cmpi eq, %arg2, %c0_i32 : i32
    %1 = arith.extui %0 : i1 to i32
    %c0_i32_0 = arith.constant 0 : i32
    %2 = arith.cmpi ne, %1, %c0_i32_0 : i32
    scf.if %2 {
      %cst_17 = arith.constant 0.000000e+00 : f32
      %18 = vector.broadcast %cst_17 : f32 to vector<2x32xf32>
      %c0_18 = arith.constant 0 : index
      %c0_19 = arith.constant 0 : index
      %19 = vector.load %arg6[%c0_18, %c0_19] : memref<2x32xf32, #tpu.memory_space<vmem>>, vector<2x32xf32>
      tpu.vector_store %arg6[%c0_18, %c0_19], %18 {strides = array<i32>} : memref<2x32xf32, #tpu.memory_space<vmem>>, vector<2x32xf32>,
      %cst_20 = arith.constant 0.000000e+00 : f32
      %20 = vector.broadcast %cst_20 : f32 to vector<2x1xf32>
      %c0_21 = arith.constant 0 : index
      %c0_22 = arith.constant 0 : index
      %21 = vector.load %arg7[%c0_21, %c0_22] : memref<2x1xf32, #tpu.memory_space<vmem>>, vector<2x1xf32>
      tpu.vector_store %arg7[%c0_21, %c0_22], %20 {strides = array<i32>} : memref<2x1xf32, #tpu.memory_space<vmem>>, vector<2x1xf32>,
    } else {
    }
    %c0 = arith.constant 0 : index
    %c0_1 = arith.constant 0 : index
    %c0_2 = arith.constant 0 : index
    %3 = vector.load %arg3[%c0, %c0_1, %c0_2] : memref<2x8x32xf32, #tpu.memory_space<vmem>>, vector<2x8x32xf32>
    %c0_3 = arith.constant 0 : index
    %c0_4 = arith.constant 0 : index
    %c0_5 = arith.constant 0 : index
    %4 = vector.load %arg4[%c0_3, %c0_4, %c0_5] : memref<2x8x1xf32, #tpu.memory_space<vmem>>, vector<2x8x1xf32>
    %5 = vector.broadcast %4 : vector<2x8x1xf32> to vector<2x8x32xf32>
    %6 = arith.mulf %3, %5 : vector<2x8x32xf32>
    %c0_6 = arith.constant 0 : index
    %c0_7 = arith.constant 0 : index
    %7 = vector.load %arg6[%c0_6, %c0_7] : memref<2x32xf32, #tpu.memory_space<vmem>>, vector<2x32xf32>
    %cst = arith.constant dense<0.000000e+00> : vector<2x32xf32>
    %8 = vector.multi_reduction <add>, %6, %cst [1] : vector<2x8x32xf32> to vector<2x32xf32>
    %9 = arith.addf %7, %8 : vector<2x32xf32>
    %c0_8 = arith.constant 0 : index
    %c0_9 = arith.constant 0 : index
    %10 = vector.load %arg6[%c0_8, %c0_9] : memref<2x32xf32, #tpu.memory_space<vmem>>, vector<2x32xf32>
    tpu.vector_store %arg6[%c0_8, %c0_9], %9 {strides = array<i32>} : memref<2x32xf32, #tpu.memory_space<vmem>>, vector<2x32xf32>,
    %c0_10 = arith.constant 0 : index
    %c0_11 = arith.constant 0 : index
    %11 = vector.load %arg7[%c0_10, %c0_11] : memref<2x1xf32, #tpu.memory_space<vmem>>, vector<2x1xf32>
    %cst_12 = arith.constant dense<0.000000e+00> : vector<2x1xf32>
    %12 = vector.multi_reduction <add>, %4, %cst_12 [1] : vector<2x8x1xf32> to vector<2x1xf32>
    %13 = arith.addf %11, %12 : vector<2x1xf32>
    %c0_13 = arith.constant 0 : index
    %c0_14 = arith.constant 0 : index
    %14 = vector.load %arg7[%c0_13, %c0_14] : memref<2x1xf32, #tpu.memory_space<vmem>>, vector<2x1xf32>
    tpu.vector_store %arg7[%c0_13, %c0_14], %13 {strides = array<i32>} : memref<2x1xf32, #tpu.memory_space<vmem>>, vector<2x1xf32>,
    %c0_i32_15 = arith.constant 0 : i32
    %15 = arith.cmpi eq, %arg2, %c0_i32_15 : i32
    %16 = arith.extui %15 : i1 to i32
    %c0_i32_16 = arith.constant 0 : i32
    %17 = arith.cmpi ne, %16, %c0_i32_16 : i32
    scf.if %17 {
      %c0_17 = arith.constant 0 : index
      %c0_18 = arith.constant 0 : index
      %18 = vector.load %arg7[%c0_17, %c0_18] : memref<2x1xf32, #tpu.memory_space<vmem>>, vector<2x1xf32>
      %cst_19 = arith.constant 9.99999971E-10 : f32
      %19 = vector.broadcast %cst_19 : f32 to vector<2x1xf32>
      %20 = arith.maximumf %18, %19 : vector<2x1xf32>
      %c0_20 = arith.constant 0 : index
      %c0_21 = arith.constant 0 : index
      %21 = vector.load %arg6[%c0_20, %c0_21] : memref<2x32xf32, #tpu.memory_space<vmem>>, vector<2x32xf32>
      %22 = vector.broadcast %20 : vector<2x1xf32> to vector<2x32xf32>
      %23 = arith.divf %21, %22 : vector<2x32xf32>
      %c0_22 = arith.constant 0 : index
      %c0_23 = arith.constant 0 : index
      %24 = vector.load %arg5[%c0_22, %c0_23] : memref<2x32xf32, #tpu.memory_space<vmem>>, vector<2x32xf32>
      tpu.vector_store %arg5[%c0_22, %c0_23], %23 {strides = array<i32>} : memref<2x32xf32, #tpu.memory_space<vmem>>, vector<2x32xf32>,
    } else {
    }
    return
  }
  func.func @transform_0(%arg0: i32, %arg1: i32, %arg2: i32) -> (i32, i32, i32) {
    %c0_i32 = arith.constant 0 : i32
    return %arg0, %arg2, %arg1 : i32, i32, i32
  }
  func.func @transform_1(%arg0: i32, %arg1: i32, %arg2: i32) -> (i32, i32, i32) {
    %c0_i32 = arith.constant 0 : i32
    %c0_i32_0 = arith.constant 0 : i32
    return %arg0, %arg2, %c0_i32 : i32, i32, i32
  }
  func.func @transform_2(%arg0: i32, %arg1: i32, %arg2: i32) -> (i32, i32) {
    %c0_i32 = arith.constant 0 : i32
    return %arg0, %arg1 : i32, i32
  }
}

</mosaic_0001>

<llo_original>
// kernel: tpu_custom_call.1
$region0: #{tpu_custom_call.1}
  #allocation0 [shape = 'u32[]', space=smem, size = 0x4, offset = 0x4, fixed_abs, tag = 'smem constant byte address 0x4 - core index']
  #allocation1 [shape = 'u32[144,128]{1,0:T(1,128)}', space=vmem, size = 0x12000, scoped, tag = 'internal scratch']
  #allocation2 [shape = 'f32[2,32]{1,0:T(2,128)}', space=vmem, size = 0x400, scoped, tag = 'scratch operand']
  #allocation3 [shape = 'f32[2,1]{1,0:T(2,128)}', space=vmem, size = 0x400, scoped, tag = 'scratch operand']
  %s0 = inlined_call_operand.vmem [shape: f32[2,8,32], index: 0, kind: input, shape index: {}]
  %s1 = inlined_call_operand.vmem [shape: f32[2,8,1], index: 1, kind: input, shape index: {}]
  %s2 = inlined_call_operand.hbm [shape: f32[2,32], index: 2, kind: output, shape index: {}]
  %s3 = sld [smem:[#allocation0]]
  $region26: #{tpu_custom_call.1} parent=0
    _
  %s5 = ssub.s32 1, %s3
  %s6 = scalar_select 0, %s5, %s3
  $region1: #{tpu_custom_call.1} parent=0
    #allocation4 [shape = 'u8[1024]{0}', space=vmem, size = 0x400, scoped, tag = 'output window, operand 0, single buffered']
    #allocation5 [shape = 's32[1]{0}', space=sflag, size = 0x4, scoped, tag = 'scoped memory for tpu_custom_call.1']
    %7 = vsyncpa [#allocation5], 0
    // Predicated region
    $region2: #{tpu_custom_call.1} parent=1 // pred_check
      _
    $region3: #{tpu_custom_call.1} parent=1 // pred_check_branch
      %9 = sbr.rel (0) target = $region5
    $region4: #{tpu_custom_call.1} parent=1 // pred_region
      _
    $region5: #{tpu_custom_call.1} parent=1 // pred_fallthru
      _
    // Predicated region
    $region6: #{tpu_custom_call.1} parent=1 // pred_check
      _
    $region7: #{tpu_custom_call.1} parent=1 // pred_check_branch
      %11 = sbr.rel (0) target = $region9
    $region8: #{tpu_custom_call.1} parent=1 // pred_region
      _
    $region9: #{tpu_custom_call.1} parent=1 // pred_fallthru
      _
    %p12 = scmp.eq.s32.totalorder 0, 0
    // Predicated region
    $region10: #{tpu_custom_call.1} parent=1 // pred_check
      %p13 = pneg %p12
    $region11: #{tpu_custom_call.1} parent=1 // pred_check_branch
      %15 = sbr.rel (%p13) target = $region13
    $region12: #{tpu_custom_call.1} parent=1 // pred_region
      %vm16 = vcmask 254976
      %17 = vst.msk [vmem:[#allocation2] sm:$0x3] %vm16, 0.0
      %vm18 = vcmask 1024
      %19 = vst.msk [vmem:[#allocation3] sm:$0x3] %vm18, 0.0
    $region13: #{tpu_custom_call.1} parent=1 // pred_fallthru
      _
    %v20 = vld [vmem:[%s0] sm:$0xff]
    %v21 = vld [vmem:[%s0 + $0x8] sm:$0xff]
    %v22 = vld [vmem:[%s1] sm:$0xff]
    %v23 = vld [vmem:[%s1 + $0x8] sm:$0xff]
    %25 = vset.pattern.permute.xlu0 0
    %26 = vperm.xlu0 %25, %v22
    %v27 = vpop.permute.xlu0 %26
    %30 = vset.pattern.permute.xlu0 0
    %31 = vperm.xlu0 %30, %v23
    %v32 = vpop.permute.xlu0 %31
    %v34 = vmul.f32 %v20, %v27
    %v35 = vmul.f32 %v21, %v32
    %v36 = vld [vmem:[#allocation2] sm:$0x3]
    %vm37 = vcmask 261120
    %v38 = vsel %vm37, %v34, 0.0
    %v39 = vrot.slane %v38, 4
    %v40 = vadd.f32 %v38, %v39
    %v41 = vrot.slane %v40, 2
    %v42 = vadd.f32 %v40, %v41
    %v43 = vrot.slane %v42, 1
    %v44 = vadd.f32 %v42, %v43
    %v45 = vsel %vm37, %v35, 0.0
    %v46 = vrot.slane %v45, 4
    %v47 = vadd.f32 %v45, %v46
    %v48 = vrot.slane %v47, 2
    %v49 = vadd.f32 %v47, %v48
    %v50 = vrot.slane %v49, 1
    %v51 = vadd.f32 %v49, %v50
    %vm54 = vcmask 1041409
    %v55 = vsel %vm54, %v51, %v44
    %v57 = vadd.f32 %v36, %v55
    %vm58 = vcmask 254976
    %59 = vst.msk [vmem:[#allocation2] sm:$0x3] %vm58, %v57
    %v60 = vld [vmem:[#allocation3] sm:$0x3]
    %vm61 = vcmask 7168
    %v62 = vsel %vm61, %v22, 0.0
    %v63 = vrot.slane %v62, 4
    %v64 = vadd.f32 %v62, %v63
    %v65 = vrot.slane %v64, 2
    %v66 = vadd.f32 %v64, %v65
    %v67 = vrot.slane %v66, 1
    %v68 = vadd.f32 %v66, %v67
    %v69 = vsel %vm61, %v23, 0.0
    %v70 = vrot.slane %v69, 4
    %v71 = vadd.f32 %v69, %v70
    %v72 = vrot.slane %v71, 2
    %v73 = vadd.f32 %v71, %v72
    %v74 = vrot.slane %v73, 1
    %v75 = vadd.f32 %v73, %v74
    %v78 = vsel %vm54, %v75, %v68
    %v80 = vadd.f32 %v60, %v78
    %vm81 = vcmask 1024
    %82 = vst.msk [vmem:[#allocation3] sm:$0x3] %vm81, %v80
    // Predicated region
    $region14: #{tpu_custom_call.1} parent=1 // pred_check
      %p83 = pneg %p12
    $region15: #{tpu_custom_call.1} parent=1 // pred_check_branch
      %85 = sbr.rel (%p83) target = $region17
    $region16: #{tpu_custom_call.1} parent=1 // pred_region
      %v86 = vld [vmem:[#allocation3] sm:$0x3]
      %v87 = vmax.f32 %v86, 1e-09
      %v88 = vld [vmem:[#allocation2] sm:$0x3]
      %90 = vset.pattern.permute.xlu0 0
      %91 = vperm.xlu0 %90, %v87
      %v92 = vpop.permute.xlu0 %91
      %v94 = vrcp.pop %v92
      %v95 = vmul.f32 %v88, %v94
      %96 = vst.msk [vmem:[#allocation4] sm:$0x3] %vm58, %v95
    $region17: #{tpu_custom_call.1} parent=1 // pred_fallthru
      _
    // Predicated region
    $region18: #{tpu_custom_call.1} parent=1 // pred_check
      _
    $region19: #{tpu_custom_call.1} parent=1 // pred_check_branch
      %98 = sbr.rel (0) target = $region21
    $region20: #{tpu_custom_call.1} parent=1 // pred_region
      %s100 = ssub.s32 32, 32
      %101 = vsyncadd [#allocation5], %s100
      %s103 = sshll.u32 [#allocation4], 4
      %s104 = int_to_ptr.vmem [resolvable:$true] %s103
      %106 = dma.vmem_to_hbm [thread:$0]  %s104, 32, %s2, [#allocation5]
    $region21: #{tpu_custom_call.1} parent=1 // pred_fallthru
      _
    // Predicated region
    $region22: #{tpu_custom_call.1} parent=1 // pred_check
      _
    $region23: #{tpu_custom_call.1} parent=1 // pred_check_branch
      %108 = sbr.rel (0) target = $region25
    $region24: #{tpu_custom_call.1} parent=1 // pred_region
      %109 = dma.done [#allocation5], 32
    $region25: #{tpu_custom_call.1} parent=1 // pred_fallthru
      _
    %110 = vsyncpa [#allocation5], 1

</llo_original>
